<compile_context>
chip_gen: v6e
topology: v6e:2x2x1
jax: 0.10.0
libtpu: 0.0.40
codegen_flags: <defaults>
</compile_context>

<pallas_src>
import functools
import math

import jax
import jax.numpy as jnp
from jax.experimental import pallas as pl
from jax.experimental.pallas import tpu as pltpu


def encoder_linear_kernel(x_ref, w_ref, b_ref, o_ref):
    """out = x @ W_bd + b_bd : one MXU matmul, f32 accumulation, f32 bias add."""
    cdt = w_ref.dtype
    acc = jnp.dot(x_ref[...].astype(cdt), w_ref[...],
                  preferred_element_type=jnp.float32)
    o_ref[...] = (acc + b_ref[...]).astype(o_ref.dtype)


def _choose_pack(in_dim, latent, itemsize, weight_budget_bytes=2 << 20, max_pack=64):
    """Rows folded into the lane axis so pack*latent is a multiple of 128 (lane-dense
    stores) while keeping the block-diagonal weight small enough to stay VMEM-resident."""
    p = min(max_pack, 128 // math.gcd(128, latent))
    while p > 1 and (p * in_dim) * (p * latent) * itemsize > weight_budget_bytes:
        p //= 2
    return max(p, 1)


def prepare_params(torch_layout_params, compute_dtype=jnp.float32):
    """One-time parameter prep (hoisted out of the forward path).

    Input: dict w1,b1,w2,b2,w3,b3 in PyTorch nn.Linear layout (out_f, in_f) / (out_f,).
    Output: block-diagonal composed weight kron(I_pack, W_eff) in `compute_dtype`
    (use jnp.bfloat16 on v6e/v7x), tiled bias in f32, plus static pack/latent metadata.
    """
    hi = jax.lax.Precision.HIGHEST
    w1 = jnp.asarray(torch_layout_params["w1"], jnp.float32)
    w2 = jnp.asarray(torch_layout_params["w2"], jnp.float32)
    w3 = jnp.asarray(torch_layout_params["w3"], jnp.float32)
    b1 = jnp.asarray(torch_layout_params["b1"], jnp.float32)
    b2 = jnp.asarray(torch_layout_params["b2"], jnp.float32)
    b3 = jnp.asarray(torch_layout_params["b3"], jnp.float32)

    # Compose the (activation-free) layer stack offline, in f32 at HIGHEST precision.
    w_eff = jnp.dot(jnp.dot(w1.T, w2.T, precision=hi), w3.T, precision=hi)   # (in, latent)
    b_eff = jnp.dot(jnp.dot(b1, w2.T, precision=hi) + b2, w3.T, precision=hi) + b3

    in_dim, latent = int(w_eff.shape[0]), int(w_eff.shape[1])
    pack = _choose_pack(in_dim, latent, jnp.dtype(compute_dtype).itemsize)

    w_bd = jnp.kron(jnp.eye(pack, dtype=jnp.float32), w_eff).astype(compute_dtype)
    b_bd = jnp.tile(b_eff, pack)[None, :].astype(jnp.float32)   # bias stays f32
    return {"w": w_bd, "b": b_bd, "pack": int(pack), "in_dim": in_dim, "latent": latent}


@functools.partial(jax.jit, static_argnames=("pack", "latent"))
def _forward_impl(x, w_bd, b_bd, *, pack, latent):
    B, in_dim = x.shape

    # Fold `pack` rows into the lane axis (contiguous reshape -> free).  Only the
    # B % pack remainder is padded (a handful of rows), never the whole array.
    B_pad = ((B + pack - 1) // pack) * pack
    if B_pad != B:
        x = jnp.pad(x, ((0, B_pad - B), (0, 0)))
    rows = B_pad // pack
    cols_in = pack * in_dim
    cols_out = pack * latent
    xr = x.reshape(rows, cols_in)

    itm = x.dtype.itemsize
    row_bytes = (cols_in + cols_out) * itm

    # Prefer a single grid step (single TC, zero per-step pipeline overhead) for
    # small/medium batches; only tile when the x/out tiles would exceed ~4 MiB.
    # A tiled grid's ragged last block is handled by Pallas boundary masking.
    SINGLE_STEP_BYTES = 4 << 20
    if rows * row_bytes <= SINGLE_STEP_BYTES:
        tm = rows                                            # grid=(1,)
    else:
        tm = max(8, min(1024, (SINGLE_STEP_BYTES // row_bytes) // 8 * 8))
        if tm >= rows:
            tm = rows
    grid = (pl.cdiv(rows, tm),)

    weight_bytes = (w_bd.size * w_bd.dtype.itemsize + b_bd.size * b_bd.dtype.itemsize)

    # Scheduler hint so XLA overlaps this small kernel with surrounding ops.
    cost = pl.CostEstimate(
        flops=2 * rows * cols_in * cols_out,
        transcendentals=0,
        bytes_accessed=int(rows * row_bytes + weight_bytes),
    )

    # Double-buffered x/out tiles + (double-buffered) resident weights, 2x slack.
    # Cap below v7x's 64 MiB physical VMEM to leave Mosaic scratch headroom.
    vmem_est = 2 * tm * row_bytes + 2 * weight_bytes
    vmem_limit = int(min(48 * 1024 * 1024, max(4 * 1024 * 1024, 2 * vmem_est)))

    out_r = pl.pallas_call(
        encoder_linear_kernel,
        out_shape=jax.ShapeDtypeStruct((rows, cols_out), x.dtype),
        grid_spec=pltpu.PrefetchScalarGridSpec(
            num_scalar_prefetch=0,
            grid=grid,
            in_specs=[
                pl.BlockSpec((tm, cols_in), lambda i: (i, 0)),         # x (row-tiled)
                pl.BlockSpec((cols_in, cols_out), lambda i: (0, 0)),   # W_bd (VMEM-resident)
                pl.BlockSpec((1, cols_out), lambda i: (0, 0)),         # b_bd (VMEM-resident)
            ],
            out_specs=pl.BlockSpec((tm, cols_out), lambda i: (i, 0)),
        ),
        compiler_params=pltpu.CompilerParams(
            # Only shard across v7x's 2 TensorCores when there is more than one step
            # of real work; a single-step launch stays on one core (review guidance).
            dimension_semantics=("parallel",) if grid[0] > 1 else ("arbitrary",),
            vmem_limit_bytes=vmem_limit,
        ),
        cost_estimate=cost,
    )(xr, w_bd, b_bd)

    out = out_r.reshape(B_pad, latent)    # un-fold lanes back to rows (free reshape)
    return out[:B] if B_pad != B else out


def encoder_linear_forward(x, prep):
    """x: (B, in_dim).  prep: output of prepare_params()."""
    return _forward_impl(x, prep["w"], prep["b"],
                         pack=prep["pack"], latent=prep["latent"])


def init_linear_params(key, in_f, out_f, dtype=jnp.float32):
    """Deterministic init mimicking torch.nn.Linear (uniform +/- 1/sqrt(fan_in))."""
    kw, kb = jax.random.split(key)
    bound = 1.0 / math.sqrt(in_f)
    w = jax.random.uniform(kw, (out_f, in_f), dtype, -bound, bound)   # PyTorch layout
    b = jax.random.uniform(kb, (out_f,), dtype, -bound, bound)
    return w, b


def reference_forward(x, params):
    """Pure-JAX reference matching the PyTorch module semantics (layer by layer)."""
    h = x @ params["w1"].T + params["b1"]
    h = h @ params["w2"].T + params["b2"]
    h = h @ params["w3"].T + params["b3"]
    return h


if __name__ == "__main__":
    # EncoderLinear(in_dim=32, {'latent_dim': 16, 'layers_sizes': [64, 48]}):
    #   Linear(32->64) -> Linear(64->48) -> Linear(48->16), bias=True, no activations.
    batch = 500            # not a multiple of pack=8: exercises the remainder padding
    in_dim = 32
    layers_sizes = [64, 48]
    latent_dim = 16

    key = jax.random.PRNGKey(0)
    kx, k1, k2, k3 = jax.random.split(key, 4)
    x = jax.random.normal(kx, (batch, in_dim), jnp.float32)

    w1, b1 = init_linear_params(k1, in_dim, layers_sizes[0])
    w2, b2 = init_linear_params(k2, layers_sizes[0], layers_sizes[1])
    w3, b3 = init_linear_params(k3, layers_sizes[1], latent_dim)
    params = {"w1": w1, "b1": b1, "w2": w2, "b2": b2, "w3": w3, "b3": b3}

    ref = reference_forward(x, params)

    # f32 path (default; the right choice on v5e).  Composed weights are mathematically
    # identical but not bit-identical to the layer-by-layer order -> modest tolerance.
    prep_f32 = prepare_params(params, jnp.float32)
    out = jax.block_until_ready(encoder_linear_forward(x, prep_f32))
    assert out.shape == (batch, latent_dim)
    assert jnp.allclose(out, ref, atol=1e-4, rtol=1e-3), "f32 Pallas output mismatch"

    # Small ragged batch to exercise the B % pack remainder path.
    out_small = jax.block_until_ready(encoder_linear_forward(x[:13], prep_f32))
    assert out_small.shape == (13, latent_dim)
    assert jnp.allclose(out_small, ref[:13], atol=1e-4, rtol=1e-3), "ragged-batch mismatch"

    # bf16 weights/activations with f32 MXU accumulation (v6e / v7x fast path).
    prep_bf16 = prepare_params(params, jnp.bfloat16)
    out_bf16 = jax.block_until_ready(encoder_linear_forward(x, prep_bf16))
    assert out_bf16.shape == (batch, latent_dim)
    assert jnp.allclose(out_bf16, ref, atol=1e-1, rtol=1e-1), "bf16 Pallas output mismatch"

    print("KERNEL_OK")
</pallas_src>

<mosaic_0001>
module attributes {stable_mosaic.version = 11 : i64} {
  func.func @encoder_linear_kernel(%arg0: i32, %arg1: memref<63x256xf32, #tpu.memory_space<vmem>>, %arg2: memref<256x128xf32, #tpu.memory_space<vmem>>, %arg3: memref<1x128xf32, #tpu.memory_space<vmem>>, %arg4: memref<63x128xf32, #tpu.memory_space<vmem>>) attributes {dimension_semantics = [#tpu.dimension_semantics<arbitrary>], iteration_bounds = array<i64: 1>, scalar_prefetch = 0 : i64, scratch_operands = 0 : i64, tpu.core_type = #tpu.core_type<tc>, window_params = [{transform_indices = @transform_0, window_bounds = array<i64: 63, 256>}, {pipeline_mode = #tpu.pipeline_mode<synchronous>, transform_indices = @transform_1, window_bounds = array<i64: 256, 128>}, {pipeline_mode = #tpu.pipeline_mode<synchronous>, transform_indices = @transform_2, window_bounds = array<i64: 1, 128>}, {transform_indices = @transform_3, window_bounds = array<i64: 63, 128>}]} {
    %c0 = arith.constant 0 : index
    %c0_0 = arith.constant 0 : index
    %0 = vector.load %arg1[%c0, %c0_0] : memref<63x256xf32, #tpu.memory_space<vmem>>, vector<63x256xf32>
    %c0_1 = arith.constant 0 : index
    %c0_2 = arith.constant 0 : index
    %1 = vector.load %arg2[%c0_1, %c0_2] : memref<256x128xf32, #tpu.memory_space<vmem>>, vector<256x128xf32>
    %cst = arith.constant dense<0.000000e+00> : vector<63x128xf32>
    %2 = tpu.matmul %0, %1, %cst {dimension_numbers = #tpu.dot_dimension_numbers<[1], [0], [0], [1], [0, 0, 1, 1], [], []>} : vector<63x256xf32>, vector<256x128xf32>, vector<63x128xf32> -> vector<63x128xf32>
    %c0_3 = arith.constant 0 : index
    %c0_4 = arith.constant 0 : index
    %3 = vector.load %arg3[%c0_3, %c0_4] : memref<1x128xf32, #tpu.memory_space<vmem>>, vector<1x128xf32>
    %4 = vector.broadcast %3 : vector<1x128xf32> to vector<63x128xf32>
    %5 = arith.addf %2, %4 : vector<63x128xf32>
    %c0_5 = arith.constant 0 : index
    %c0_6 = arith.constant 0 : index
    %6 = vector.load %arg4[%c0_5, %c0_6] : memref<63x128xf32, #tpu.memory_space<vmem>>, vector<63x128xf32>
    tpu.vector_store %arg4[%c0_5, %c0_6], %5 {strides = array<i32>} : memref<63x128xf32, #tpu.memory_space<vmem>>, vector<63x128xf32>,
    return
  }
  func.func @transform_0(%arg0: i32) -> (i32, i32) {
    %c0_i32 = arith.constant 0 : i32
    %c0_i32_0 = arith.constant 0 : i32
    return %arg0, %c0_i32 : i32, i32
  }
  func.func @transform_1(%arg0: i32) -> (i32, i32) {
    %c0_i32 = arith.constant 0 : i32
    %c0_i32_0 = arith.constant 0 : i32
    %c0_i32_1 = arith.constant 0 : i32
    return %c0_i32, %c0_i32_0 : i32, i32
  }
  func.func @transform_2(%arg0: i32) -> (i32, i32) {
    %c0_i32 = arith.constant 0 : i32
    %c0_i32_0 = arith.constant 0 : i32
    %c0_i32_1 = arith.constant 0 : i32
    return %c0_i32, %c0_i32_0 : i32, i32
  }
  func.func @transform_3(%arg0: i32) -> (i32, i32) {
    %c0_i32 = arith.constant 0 : i32
    %c0_i32_0 = arith.constant 0 : i32
    return %arg0, %c0_i32 : i32, i32
  }
}

</mosaic_0001>

<llo_original>
// kernel: _forward_impl.1
$region0: #{_forward_impl.1}
  #allocation0 [shape = 'u32[]', space=smem, size = 0x4, offset = 0x4, fixed_abs, tag = 'smem constant byte address 0x4 - core index']
  #allocation1 [shape = 'u32[144,128]{1,0:T(1,128)}', space=vmem, size = 0x12000, scoped, tag = 'internal scratch']
  %s0 = inlined_call_operand.vmem [shape: f32[63,256], index: 0, kind: input, shape index: {}]
  %s1 = inlined_call_operand.vmem [shape: f32[256,128], index: 1, kind: input, shape index: {}]
  %s2 = inlined_call_operand.vmem [shape: f32[1,128], index: 2, kind: input, shape index: {}]
  %s3 = inlined_call_operand.vmem [shape: f32[63,128], index: 3, kind: output, shape index: {}]
  %s4 = sld [smem:[#allocation0]]
  $region22: #{_forward_impl.1} parent=0
    _
  %s6 = ssub.s32 1, %s4
  %s7 = scalar_select 0, %s6, %s4
  // Predicated region
  $region2: #{_forward_impl.1} parent=0 // pred_check
    _
  $region3: #{_forward_impl.1} parent=0 // pred_check_branch
    %9 = sbr.rel (0) target = $region5
  $region4: #{_forward_impl.1} parent=0 // pred_region
    _
  $region5: #{_forward_impl.1} parent=0 // pred_fallthru
    _
  // Predicated region
  $region6: #{_forward_impl.1} parent=0 // pred_check
    _
  $region7: #{_forward_impl.1} parent=0 // pred_check_branch
    %11 = sbr.rel (0) target = $region9
  $region8: #{_forward_impl.1} parent=0 // pred_region
    _
  $region9: #{_forward_impl.1} parent=0 // pred_fallthru
    _
  // Predicated region
  $region10: #{_forward_impl.1} parent=0 // pred_check
    _
  $region11: #{_forward_impl.1} parent=0 // pred_check_branch
    %13 = sbr.rel (0) target = $region13
  $region12: #{_forward_impl.1} parent=0 // pred_region
    _
  $region13: #{_forward_impl.1} parent=0 // pred_fallthru
    _
  %v14 = vld [vmem:[%s0] sm:$0xff]
  %v15 = vld [vmem:[%s0 + $0x8] sm:$0xff]
  %v16 = vld [vmem:[%s0 + $0x10] sm:$0xff]
  %v17 = vld [vmem:[%s0 + $0x18] sm:$0xff]
  %v18 = vld [vmem:[%s0 + $0x20] sm:$0xff]
  %v19 = vld [vmem:[%s0 + $0x28] sm:$0xff]
  %v20 = vld [vmem:[%s0 + $0x30] sm:$0xff]
  %v21 = vld [vmem:[%s0 + $0x38] sm:$0xff]
  %v22 = vld [vmem:[%s0 + $0x40] sm:$0xff]
  %v23 = vld [vmem:[%s0 + $0x48] sm:$0xff]
  %v24 = vld [vmem:[%s0 + $0x50] sm:$0xff]
  %v25 = vld [vmem:[%s0 + $0x58] sm:$0xff]
  %v26 = vld [vmem:[%s0 + $0x60] sm:$0xff]
  %v27 = vld [vmem:[%s0 + $0x68] sm:$0xff]
  %v28 = vld [vmem:[%s0 + $0x70] sm:$0x7f]
  %v29 = vld [vmem:[%s0 + $0x78] sm:$0x7f]
  %v30 = vld [vmem:[%s1] sm:$0xff]
  %v31 = vld [vmem:[%s1 + $0x8] sm:$0xff]
  %v32 = vld [vmem:[%s1 + $0x10] sm:$0xff]
  %v33 = vld [vmem:[%s1 + $0x18] sm:$0xff]
  %v34 = vld [vmem:[%s1 + $0x20] sm:$0xff]
  %v35 = vld [vmem:[%s1 + $0x28] sm:$0xff]
  %v36 = vld [vmem:[%s1 + $0x30] sm:$0xff]
  %v37 = vld [vmem:[%s1 + $0x38] sm:$0xff]
  %v38 = vld [vmem:[%s1 + $0x40] sm:$0xff]
  %v39 = vld [vmem:[%s1 + $0x48] sm:$0xff]
  %v40 = vld [vmem:[%s1 + $0x50] sm:$0xff]
  %v41 = vld [vmem:[%s1 + $0x58] sm:$0xff]
  %v42 = vld [vmem:[%s1 + $0x60] sm:$0xff]
  %v43 = vld [vmem:[%s1 + $0x68] sm:$0xff]
  %v44 = vld [vmem:[%s1 + $0x70] sm:$0xff]
  %v45 = vld [vmem:[%s1 + $0x78] sm:$0xff]
  %v46 = vld [vmem:[%s1 + $0x80] sm:$0xff]
  %v47 = vld [vmem:[%s1 + $0x88] sm:$0xff]
  %v48 = vld [vmem:[%s1 + $0x90] sm:$0xff]
  %v49 = vld [vmem:[%s1 + $0x98] sm:$0xff]
  %v50 = vld [vmem:[%s1 + $0xa0] sm:$0xff]
  %v51 = vld [vmem:[%s1 + $0xa8] sm:$0xff]
  %v52 = vld [vmem:[%s1 + $0xb0] sm:$0xff]
  %v53 = vld [vmem:[%s1 + $0xb8] sm:$0xff]
  %v54 = vld [vmem:[%s1 + $0xc0] sm:$0xff]
  %v55 = vld [vmem:[%s1 + $0xc8] sm:$0xff]
  %v56 = vld [vmem:[%s1 + $0xd0] sm:$0xff]
  %v57 = vld [vmem:[%s1 + $0xd8] sm:$0xff]
  %v58 = vld [vmem:[%s1 + $0xe0] sm:$0xff]
  %v59 = vld [vmem:[%s1 + $0xe8] sm:$0xff]
  %v60 = vld [vmem:[%s1 + $0xf0] sm:$0xff]
  %v61 = vld [vmem:[%s1 + $0xf8] sm:$0xff]
  %v62 = vld [vmem:[%s2] sm:$0x1]
  %v64 = vlaneseq
  %v65 = vshrl.u32 %v64, 7
  %v66 = vsub.s32 0, %v65
  %v67 = vrot.slane %v62, %v66
  %69 = vmatprep.subr.mxu0 0.0
  %70 = vmatpush1.msra.mxu0 %v45
  %71 = vmatprep.subr.mxu0 0.0
  %72 = vmatpush1.msra.mxu0 %v44
  %73 = vmatprep.subr.mxu0 0.0
  %74 = vmatpush1.msra.mxu0 %v43
  %75 = vmatprep.subr.mxu0 0.0
  %76 = vmatpush1.msra.mxu0 %v42
  %77 = vmatprep.subr.mxu0 0.0
  %78 = vmatpush1.msra.mxu0 %v41
  %79 = vmatprep.subr.mxu0 0.0
  %80 = vmatpush1.msra.mxu0 %v40
  %81 = vmatprep.subr.mxu0 0.0
  %82 = vmatpush1.msra.mxu0 %v39
  %83 = vmatprep.subr.mxu0 0.0
  %84 = vmatpush1.msra.mxu0 %v38
  %85 = vmatprep.subr.mxu0 0.0
  %86 = vmatpush1.msra.mxu0 %v37
  %87 = vmatprep.subr.mxu0 0.0
  %88 = vmatpush1.msra.mxu0 %v36
  %89 = vmatprep.subr.mxu0 0.0
  %90 = vmatpush1.msra.mxu0 %v35
  %91 = vmatprep.subr.mxu0 0.0
  %92 = vmatpush1.msra.mxu0 %v34
  %93 = vmatprep.subr.mxu0 0.0
  %94 = vmatpush1.msra.mxu0 %v33
  %95 = vmatprep.subr.mxu0 0.0
  %96 = vmatpush1.msra.mxu0 %v32
  %97 = vmatprep.subr.mxu0 0.0
  %98 = vmatpush1.msra.mxu0 %v31
  %99 = vmatprep.subr.mxu0 0.0
  %100 = vmatpush1.msra.mxu0 %v30
  %101 = vmatprep.subr.mxu0 0.0
  %102 = vmatpush2.msra.mxu0 %v61
  %103 = vmatprep.subr.mxu0 0.0
  %104 = vmatpush2.msra.mxu0 %v60
  %105 = vmatprep.subr.mxu0 0.0
  %106 = vmatpush2.msra.mxu0 %v59
  %107 = vmatprep.subr.mxu0 0.0
  %108 = vmatpush2.msra.mxu0 %v58
  %109 = vmatprep.subr.mxu0 0.0
  %110 = vmatpush2.msra.mxu0 %v57
  %111 = vmatprep.subr.mxu0 0.0
  %112 = vmatpush2.msra.mxu0 %v56
  %113 = vmatprep.subr.mxu0 0.0
  %114 = vmatpush2.msra.mxu0 %v55
  %115 = vmatprep.subr.mxu0 0.0
  %116 = vmatpush2.msra.mxu0 %v54
  %117 = vmatprep.subr.mxu0 0.0
  %118 = vmatpush2.msra.mxu0 %v53
  %119 = vmatprep.subr.mxu0 0.0
  %120 = vmatpush2.msra.mxu0 %v52
  %121 = vmatprep.subr.mxu0 0.0
  %122 = vmatpush2.msra.mxu0 %v51
  %123 = vmatprep.subr.mxu0 0.0
  %124 = vmatpush2.msra.mxu0 %v50
  %125 = vmatprep.subr.mxu0 0.0
  %126 = vmatpush2.msra.mxu0 %v49
  %127 = vmatprep.subr.mxu0 0.0
  %128 = vmatpush2.msra.mxu0 %v48
  %129 = vmatprep.subr.mxu0 0.0
  %130 = vmatpush2.msra.mxu0 %v47
  %131 = vmatprep.subr.mxu0 0.0
  %132 = vmatpush2.msra.mxu0 %v46
  %133 = vmatprep.mubr.f32.mxu0 %v15
  %134 = vmatmul.mubr.f32.gmra.mxu0 %v14
  %v135 = vpop.f32.mrf.mxu0
  %v136 = vadd.f32 %v67, %v135
  %v137 = vpop.f32.mrf.mxu0
  %138 = vmatprep.mubr.f32.mxu0 %v17
  %139 = vmatmul.mubr.f32.gmra.mxu0 %v16
  %v140 = vpop.f32.mrf.mxu0
  %v141 = vadd.f32 %v67, %v140
  %v142 = vpop.f32.mrf.mxu0
  %143 = vmatprep.mubr.f32.mxu0 %v19
  %144 = vmatmul.mubr.f32.gmra.mxu0 %v18
  %v145 = vpop.f32.mrf.mxu0
  %v146 = vadd.f32 %v67, %v145
  %v147 = vpop.f32.mrf.mxu0
  %148 = vmatprep.mubr.f32.mxu0 %v21
  %149 = vmatmul.mubr.f32.gmra.mxu0 %v20
  %v150 = vpop.f32.mrf.mxu0
  %v151 = vadd.f32 %v67, %v150
  %v152 = vpop.f32.mrf.mxu0
  %153 = vmatprep.mubr.f32.mxu0 %v23
  %154 = vmatmul.mubr.f32.gmra.mxu0 %v22
  %v155 = vpop.f32.mrf.mxu0
  %v156 = vadd.f32 %v67, %v155
  %v157 = vpop.f32.mrf.mxu0
  %158 = vmatprep.mubr.f32.mxu0 %v25
  %159 = vmatmul.mubr.f32.gmra.mxu0 %v24
  %v160 = vpop.f32.mrf.mxu0
  %v161 = vadd.f32 %v67, %v160
  %v162 = vpop.f32.mrf.mxu0
  %163 = vmatprep.mubr.f32.mxu0 %v27
  %164 = vmatmul.mubr.f32.gmra.mxu0 %v26
  %v165 = vpop.f32.mrf.mxu0
  %v166 = vadd.f32 %v67, %v165
  %v167 = vpop.f32.mrf.mxu0
  %168 = vmatprep.mubr.f32.mxu0 %v29
  %169 = vmatmul.mubr.f32.gmra.mxu0 %v28
  %v170 = vpop.f32.mrf.mxu0
  %v171 = vadd.f32 %v67, %v170
  %v172 = vpop.f32.mrf.mxu0
  %173 = vdwg.mxu0
  %174 = vst [vmem:[%s3] sm:$0xff] %v136
  %175 = vst [vmem:[%s3 + $0x8] sm:$0xff] %v141
  %176 = vst [vmem:[%s3 + $0x10] sm:$0xff] %v146
  %177 = vst [vmem:[%s3 + $0x18] sm:$0xff] %v151
  %178 = vst [vmem:[%s3 + $0x20] sm:$0xff] %v156
  %179 = vst [vmem:[%s3 + $0x28] sm:$0xff] %v161
  %180 = vst [vmem:[%s3 + $0x30] sm:$0xff] %v166
  %181 = vst [vmem:[%s3 + $0x38] sm:$0x7f] %v171
  // Predicated region
  $region14: #{_forward_impl.1} parent=0 // pred_check
    _
  $region15: #{_forward_impl.1} parent=0 // pred_check_branch
    %183 = sbr.rel (0) target = $region17
  $region16: #{_forward_impl.1} parent=0 // pred_region
    _
  $region17: #{_forward_impl.1} parent=0 // pred_fallthru
    _
  // Predicated region
  $region18: #{_forward_impl.1} parent=0 // pred_check
    _
  $region19: #{_forward_impl.1} parent=0 // pred_check_branch
    %185 = sbr.rel (0) target = $region21
  $region20: #{_forward_impl.1} parent=0 // pred_region
    _
  $region21: #{_forward_impl.1} parent=0 // pred_fallthru
    _

</llo_original>
